<compile_context>
chip_gen: v6e
topology: v6e:2x2x1
jax: 0.10.0
libtpu: 0.0.40
codegen_flags: <defaults>
</compile_context>

<pallas_src>
import functools

import jax
import jax.numpy as jnp
from jax.experimental import pallas as pl
from jax.experimental.pallas import tpu as pltpu


def _round_up(x, m):
    return ((x + m - 1) // m) * m


def _vmem_limit_bytes():
    """Scoped VMEM budget: ~100 MiB on 128-MiB parts (v5e/v6e), ~48 MiB on v7x."""
    cap = 128 * 1024 * 1024
    try:
        cap = int(getattr(pltpu.get_tpu_info(), "vmem_capacity_bytes", cap))
    except Exception:
        pass
    limit = min(cap - 16 * 1024 * 1024, 100 * 1024 * 1024)
    return int(max(limit, 32 * 1024 * 1024))


def _batch_block(n, max_nb=64):
    """Batch-block size for the leading 'parallel' grid axis (v7x megacore)."""
    if n <= max_nb:
        return n, n                       # single block; block dim == full dim
    npad = _round_up(n, max_nb)
    return npad, max_nb


# ----------------------------------------------------------------------------
# 1. Tiled linear kernel (used for the vocab projection)
# ----------------------------------------------------------------------------
def _linear_kernel(x_ref, w_ref, b_ref, o_ref, acc_ref, *, apply_relu):
    k = pl.program_id(2)

    @pl.when(k == 0)
    def _init():
        acc_ref[...] = jnp.zeros_like(acc_ref)

    acc_ref[...] += jnp.dot(
        x_ref[...].astype(jnp.bfloat16), w_ref[...],
        preferred_element_type=jnp.float32)

    @pl.when(k == pl.num_programs(2) - 1)
    def _finalize():
        y = acc_ref[...] + b_ref[...]
        if apply_relu:
            y = jnp.maximum(y, 0.0)
        o_ref[...] = y.astype(o_ref.dtype)


def pallas_linear(x, w, b, apply_relu=False, tm=None, tn=512, tk=512):
    """x: (M, K) f32, w: (K, N), b: (N,) f32 -> (M, N) f32."""
    M, K = x.shape
    Kw, N = w.shape
    assert K == Kw
    # One M block when M is small so the (K, N) weight streams from HBM exactly
    # once (v5e is weight-streaming bound); 256-row tiles otherwise to fill the
    # 256-native MXU on v6e/v7x.  Tiles stay (8,128)-aligned via padding.
    if tm is None:
        tm = _round_up(M, 8) if M <= 256 else 256
    tn = min(tn, _round_up(N, 128))
    tk = min(tk, _round_up(K, 128))
    Mp, Kp, Np = _round_up(M, tm), _round_up(K, tk), _round_up(N, tn)

    xp = jnp.pad(x, ((0, Mp - M), (0, Kp - K)))
    # Ensure the MXU RHS is bf16 (an f32 RHS silently triples MXU passes).
    wp = jnp.pad(w.astype(jnp.bfloat16), ((0, Kp - K), (0, Np - N)))
    bp = jnp.pad(b, (0, Np - N)).reshape(1, Np)

    grid = (Mp // tm, Np // tn, Kp // tk)
    flops = int(2 * Mp * Kp * Np)
    bytes_accessed = int(xp.size * 4 + wp.size * 2 + bp.size * 4 + Mp * Np * 4)

    out = pl.pallas_call(
        functools.partial(_linear_kernel, apply_relu=apply_relu),
        out_shape=jax.ShapeDtypeStruct((Mp, Np), jnp.float32),
        grid_spec=pltpu.PrefetchScalarGridSpec(
            num_scalar_prefetch=0,
            grid=grid,
            in_specs=[
                pl.BlockSpec((tm, tk), lambda i, j, k: (i, k)),
                pl.BlockSpec((tk, tn), lambda i, j, k: (k, j)),
                pl.BlockSpec((1, tn), lambda i, j, k: (0, j)),
            ],
            out_specs=pl.BlockSpec((tm, tn), lambda i, j, k: (i, j)),
            scratch_shapes=[pltpu.VMEM((tm, tn), jnp.float32)],
        ),
        compiler_params=pltpu.CompilerParams(
            dimension_semantics=("parallel", "parallel", "arbitrary"),
            vmem_limit_bytes=_vmem_limit_bytes()),
        cost_estimate=pl.CostEstimate(flops=flops, transcendentals=0,
                                      bytes_accessed=bytes_accessed),
    )(xp, wp, bp)
    return out[:M, :N]


# ----------------------------------------------------------------------------
# 2. Fused encoder: mean-pool FIRST (linear commutes), then patch-embed matmul
#    + head matmul + ReLU.  Grid = (batch blocks [parallel], patch blocks).
# ----------------------------------------------------------------------------
def _encoder_kernel(p_ref, wp_ref, bp_ref, wh_ref, bh_ref, o_ref, acc_ref, *,
                    inv_num_patches):
    j = pl.program_id(1)

    @pl.when(j == 0)
    def _init():
        acc_ref[...] = jnp.zeros_like(acc_ref)

    # Mean-pool commutes with the linear patch embedding: sum patches first
    # (VPU reduction) and matmul once at the end -> no nP x FLOP blowup.
    acc_ref[...] += jnp.sum(p_ref[...], axis=1)

    @pl.when(j == pl.num_programs(1) - 1)
    def _finalize():
        pooled = acc_ref[...] * inv_num_patches                       # (NB, pd)
        emb = jnp.dot(pooled.astype(jnp.bfloat16), wp_ref[...],
                      preferred_element_type=jnp.float32) + bp_ref[...]
        feats = jnp.dot(emb.astype(jnp.bfloat16), wh_ref[...],
                        preferred_element_type=jnp.float32) + bh_ref[...]
        # ReLU; Dropout(0.5) is identity in eval mode.
        o_ref[...] = jnp.maximum(feats, 0.0).astype(o_ref.dtype)


def pallas_encoder(patches, w_patch, b_patch, w_head, b_head):
    """patches: (N, nP, pd) f32 -> features (N, Dp) f32 (lane-dense, padded)."""
    Nb, nP, pd = patches.shape
    vit_p = w_patch.shape[1]
    Dp = w_head.shape[1]

    Npad, NB = _batch_block(Nb)
    if Npad != Nb:
        patches = jnp.pad(patches, ((0, Npad - Nb), (0, 0), (0, 0)))

    if nP <= 64:
        pb, nP_pad = nP, nP
    else:
        pb = 32
        nP_pad = _round_up(nP, pb)
    if nP_pad != nP:   # zero patches add 0 to the sum; divide by the true count
        patches = jnp.pad(patches, ((0, 0), (0, nP_pad - nP), (0, 0)))

    grid = (Npad // NB, nP_pad // pb)
    flops = int(Npad * nP_pad * pd + 2 * Npad * pd * vit_p + 2 * Npad * vit_p * Dp)
    bytes_accessed = int(patches.size * 4 + w_patch.size * 2 + w_head.size * 2
                         + Npad * Dp * 4)

    out = pl.pallas_call(
        functools.partial(_encoder_kernel, inv_num_patches=1.0 / nP),
        out_shape=jax.ShapeDtypeStruct((Npad, Dp), jnp.float32),
        grid_spec=pltpu.PrefetchScalarGridSpec(
            num_scalar_prefetch=0,
            grid=grid,
            in_specs=[
                pl.BlockSpec((NB, pb, pd), lambda b, j: (b, j, 0)),
                pl.BlockSpec((pd, vit_p), lambda b, j: (0, 0)),
                pl.BlockSpec((1, vit_p), lambda b, j: (0, 0)),
                pl.BlockSpec((vit_p, Dp), lambda b, j: (0, 0)),
                pl.BlockSpec((1, Dp), lambda b, j: (0, 0)),
            ],
            out_specs=pl.BlockSpec((NB, Dp), lambda b, j: (b, 0)),
            scratch_shapes=[pltpu.VMEM((NB, pd), jnp.float32)],
        ),
        compiler_params=pltpu.CompilerParams(
            dimension_semantics=("parallel", "arbitrary"),
            vmem_limit_bytes=_vmem_limit_bytes()),
        cost_estimate=pl.CostEstimate(flops=flops, transcendentals=0,
                                      bytes_accessed=bytes_accessed),
    )(patches, w_patch, b_patch.reshape(1, -1), w_head, b_head.reshape(1, -1))
    return out[:Nb]


# ----------------------------------------------------------------------------
# 3. Fused multi-layer LSTM, cuDNN-style:
#    grid = (batch blocks [parallel], time blocks [arbitrary]); inside a time
#    block, layers are the OUTER loop, the input projection for all tb steps is
#    one batched matmul (M = tb*NB), only h @ W_hh stays in the serial loop.
# ----------------------------------------------------------------------------
def _lstm_stack_kernel(x_ref, wih_ref, whh_ref, b_ref, out_ref,
                       h_sc, c_sc, xh_sc, gx_sc, *, num_layers, dp, tb, nb):
    tblk = pl.program_id(1)

    @pl.when(tblk == 0)
    def _init():
        h_sc[...] = jnp.zeros_like(h_sc)
        c_sc[...] = jnp.zeros_like(c_sc)

    # Stage the time block's inputs into a 2-D (tb*NB, Dp) bf16 buffer so the
    # per-layer input projection is ONE MXU matmul (static slices, no reshape).
    for t in range(tb):
        xh_sc[t * nb:(t + 1) * nb, :] = x_ref[t].astype(jnp.bfloat16)

    for l in range(num_layers):                     # layers outer (cuDNN-style)
        # Batched input projection + bias for the whole time block.
        gx_sc[...] = jnp.dot(xh_sc[...], wih_ref[l],
                             preferred_element_type=jnp.float32) + b_ref[l]

        last_layer = (l == num_layers - 1)

        # Sequential recurrence: only h @ W_hh remains on the critical path.
        # NOTE: static unroll over tb (<=16); per-step temporaries are small.
        for t in range(tb):
            gates = gx_sc[t * nb:(t + 1) * nb, :] + jnp.dot(
                h_sc[l], whh_ref[l], preferred_element_type=jnp.float32)
            # PyTorch gate order i, f, g, o; slices are 128-lane aligned.
            # TODO(synk): when hidden_size < 128, pack the 4 gates into
            # round_up(4H,128) lanes (pltpu.roll alignment) to cut the 4x
            # MXU/EUP inflation from per-gate Dp padding.
            i_g = jax.nn.sigmoid(gates[:, 0 * dp:1 * dp])
            f_g = jax.nn.sigmoid(gates[:, 1 * dp:2 * dp])
            g_g = jnp.tanh(gates[:, 2 * dp:3 * dp])
            o_g = jax.nn.sigmoid(gates[:, 3 * dp:4 * dp])
            c_new = f_g * c_sc[l] + i_g * g_g
            h_new = o_g * jnp.tanh(c_new)
            c_sc[l] = c_new
            h_sc[l] = h_new.astype(jnp.bfloat16)    # h only ever feeds the MXU
            if last_layer:
                out_ref[t] = h_new.astype(out_ref.dtype)
            else:
                xh_sc[t * nb:(t + 1) * nb, :] = h_new.astype(jnp.bfloat16)


def pallas_lstm_stack(seq, wih_all, whh_all, b_all):
    """seq: (T, N, Dp) f32; weights stacked over layers.  Returns (T, N, Dp)."""
    T, N, Dp = seq.shape
    L = wih_all.shape[0]

    # Batch blocking -> "parallel" grid axis (feeds both TCs on v7x).
    Npad, NB = _batch_block(N)
    if Npad != N:
        seq = jnp.pad(seq, ((0, 0), (0, Npad - N), (0, 0)))

    # Time blocking amortizes the ~0.35us/grid-step overhead; capped at 16 to
    # bound the static unroll / vreg pressure inside the kernel.
    tb = T if T <= 16 else 16
    Tp = _round_up(T, tb)
    if Tp != T:
        # Trailing padded timesteps only corrupt the (discarded) final h/c.
        seq = jnp.pad(seq, ((0, Tp - T), (0, 0), (0, 0)))

    grid = (Npad // NB, Tp // tb)
    flops = int(4 * L * Tp * Npad * Dp * 4 * Dp)          # ih + hh matmuls
    transcendentals = int(5 * L * Tp * Npad * Dp)
    bytes_accessed = int(Tp * Npad * Dp * 4 * 2 + 2 * (L * Dp * 4 * Dp * 2)
                         + L * 4 * Dp * 4)

    out = pl.pallas_call(
        functools.partial(_lstm_stack_kernel, num_layers=L, dp=Dp, tb=tb, nb=NB),
        out_shape=jax.ShapeDtypeStruct((Tp, Npad, Dp), jnp.float32),
        grid_spec=pltpu.PrefetchScalarGridSpec(
            num_scalar_prefetch=0,
            grid=grid,
            in_specs=[
                pl.BlockSpec((tb, NB, Dp), lambda b, t: (t, b, 0)),
                # Constant-index weight blocks stay VMEM-resident across steps.
                # TODO(synk): on v7x (64 MiB VMEM) mark these three specs with
                # pipeline_mode=pl.Buffered(1) to single-buffer resident weights.
                pl.BlockSpec((L, Dp, 4 * Dp), lambda b, t: (0, 0, 0)),
                pl.BlockSpec((L, Dp, 4 * Dp), lambda b, t: (0, 0, 0)),
                pl.BlockSpec((L, 1, 4 * Dp), lambda b, t: (0, 0, 0)),
            ],
            out_specs=pl.BlockSpec((tb, NB, Dp), lambda b, t: (t, b, 0)),
            scratch_shapes=[
                pltpu.VMEM((L, NB, Dp), jnp.bfloat16),      # h per layer (bf16)
                pltpu.VMEM((L, NB, Dp), jnp.float32),       # c per layer (f32)
                pltpu.VMEM((tb * NB, Dp), jnp.bfloat16),    # staged layer inputs
                pltpu.VMEM((tb * NB, 4 * Dp), jnp.float32), # batched x@W_ih + b
            ],
        ),
        compiler_params=pltpu.CompilerParams(
            dimension_semantics=("parallel", "arbitrary"),   # time is sequential
            vmem_limit_bytes=_vmem_limit_bytes()),
        cost_estimate=pl.CostEstimate(flops=flops,
                                      transcendentals=transcendentals,
                                      bytes_accessed=bytes_accessed),
    )(seq, wih_all, whh_all, b_all)
    return out[:T, :N]


# ----------------------------------------------------------------------------
# Model wrapper (parameter setup + glue in plain JAX)
# ----------------------------------------------------------------------------
def _pad_gate_cols(w, H, Dp):
    """(rows, 4H) -> (rows, 4Dp): gate k placed at columns [k*Dp, k*Dp+H)."""
    out = jnp.zeros((w.shape[0], 4 * Dp), w.dtype)
    for k in range(4):
        out = out.at[:, k * Dp:k * Dp + H].set(w[:, k * H:(k + 1) * H])
    return out


class CNNtoLSTMPallas:
    def __init__(self, embed_size, hidden_size, vocab_size, num_layers,
                 vit_dim=64, patch=16, in_ch=3, key=jax.random.PRNGKey(0)):
        self.embed_size = embed_size
        self.hidden_size = hidden_size
        self.vocab_size = vocab_size
        self.num_layers = num_layers
        self.vit_dim = vit_dim
        self.patch = patch
        self.in_ch = in_ch

        # Common lane-aligned width used for features / embeddings / hiddens.
        self.Dp = _round_up(max(embed_size, hidden_size), 128)
        self.vit_pad = _round_up(vit_dim, 128)
        patch_dim = in_ch * patch * patch
        self.patch_dim = patch_dim
        self.pd_pad = _round_up(patch_dim, 128)

        ks = jax.random.split(key, 16 + 4 * num_layers)
        s = 0.05
        Dp, Vp, Pp = self.Dp, self.vit_pad, self.pd_pad

        # --- Encoder (ViT stand-in): patch embedding + linear head ---
        w_patch = jnp.zeros((Pp, Vp), jnp.float32).at[:patch_dim, :vit_dim].set(
            s * jax.random.normal(ks[0], (patch_dim, vit_dim), jnp.float32))
        b_patch = jnp.zeros((Vp,), jnp.float32).at[:vit_dim].set(
            s * jax.random.normal(ks[1], (vit_dim,), jnp.float32))
        w_head = jnp.zeros((Vp, Dp), jnp.float32).at[:vit_dim, :embed_size].set(
            s * jax.random.normal(ks[2], (vit_dim, embed_size), jnp.float32))
        b_head = jnp.zeros((Dp,), jnp.float32).at[:embed_size].set(
            s * jax.random.normal(ks[3], (embed_size,), jnp.float32))
        self.w_patch = w_patch.astype(jnp.bfloat16)
        self.b_patch = b_patch
        self.w_head = w_head.astype(jnp.bfloat16)
        self.b_head = b_head

        # --- Decoder: embedding table (pre-padded to Dp; padded lanes = 0) ---
        self.embed_table = jnp.zeros((vocab_size, Dp), jnp.float32).at[
            :, :embed_size].set(
            s * jax.random.normal(ks[4], (vocab_size, embed_size), jnp.float32))

        # --- Decoder: stacked LSTM weights (stored transposed: x @ W) ---
        H = hidden_size
        wih_list, whh_list, b_list = [], [], []
        for layer in range(num_layers):
            e_in = embed_size if layer == 0 else hidden_size
            k0, k1, k2, k3 = ks[5 + 4 * layer: 9 + 4 * layer]
            wih = s * jax.random.normal(k0, (e_in, 4 * H), jnp.float32)
            whh = s * jax.random.normal(k1, (H, 4 * H), jnp.float32)
            # PyTorch nn.LSTM has b_ih and b_hh; they are summed in the cell.
            b_ih = s * jax.random.normal(k2, (4 * H,), jnp.float32)
            b_hh = s * jax.random.normal(k3, (4 * H,), jnp.float32)
            wih_p = jnp.pad(_pad_gate_cols(wih, H, Dp), ((0, Dp - e_in), (0, 0)))
            whh_p = jnp.pad(_pad_gate_cols(whh, H, Dp), ((0, Dp - H), (0, 0)))
            b_p = _pad_gate_cols((b_ih + b_hh).reshape(1, 4 * H), H, Dp)
            wih_list.append(wih_p)
            whh_list.append(whh_p)
            b_list.append(b_p)
        self.wih_all = jnp.stack(wih_list).astype(jnp.bfloat16)   # (L, Dp, 4Dp)
        self.whh_all = jnp.stack(whh_list).astype(jnp.bfloat16)   # (L, Dp, 4Dp)
        self.b_all = jnp.stack(b_list)                             # (L, 1, 4Dp)

        # --- Decoder: output linear (rows padded to Dp with zeros) ---
        w_out = jnp.zeros((Dp, vocab_size), jnp.float32).at[:hidden_size, :].set(
            s * jax.random.normal(ks[5 + 4 * num_layers],
                                  (hidden_size, vocab_size), jnp.float32))
        self.w_out = w_out.astype(jnp.bfloat16)
        self.b_out = s * jax.random.normal(ks[6 + 4 * num_layers],
                                           (vocab_size,), jnp.float32)

    # --- EncoderCNN ---
    def encode(self, images):
        """images: (N, C, H, W) -> features (N, Dp); lanes beyond embed are 0."""
        N, C, Hi, Wi = images.shape
        P = self.patch
        # Patchify (glue): (N, C, H, W) -> (N, num_patches, C*P*P)
        x = images.reshape(N, C, Hi // P, P, Wi // P, P)
        x = x.transpose(0, 2, 4, 1, 3, 5).reshape(
            N, (Hi // P) * (Wi // P), C * P * P)
        if self.pd_pad != self.patch_dim:
            x = jnp.pad(x, ((0, 0), (0, 0), (0, self.pd_pad - self.patch_dim)))
        # Fused: mean-pool + patch matmul + head + ReLU (Dropout = identity).
        return pallas_encoder(x, self.w_patch, self.b_patch,
                              self.w_head, self.b_head)

    # --- DecoderRNN ---
    def decode(self, features, captions):
        """features: (N, Dp), captions: (T, N) int32 -> outputs (T+1, N, V)."""
        # Embedding lookup (gather glue); Dropout(0.5) is identity in eval mode.
        # TODO(synk): fuse the caption-embedding gather into the LSTM kernel via
        # scalar prefetch to avoid the (T, N, Dp) HBM round trip.
        embeddings = jnp.take(self.embed_table, captions, axis=0)   # (T, N, Dp)
        seq = jnp.concatenate([features[None, :, :], embeddings], axis=0)

        # All LSTM layers fused into a single pallas_call.
        hiddens = pallas_lstm_stack(seq, self.wih_all, self.whh_all, self.b_all)

        Ts, N, Dp = hiddens.shape
        logits = pallas_linear(hiddens.reshape(Ts * N, Dp),
                               self.w_out, self.b_out)               # (Ts*N, V)
        return logits.reshape(Ts, N, self.vocab_size)

    def __call__(self, images, captions):
        features = self.encode(images)
        return self.decode(features, captions)


# ----------------------------------------------------------------------------
# Demo
# ----------------------------------------------------------------------------
if __name__ == "__main__":
    embed_size = 32
    hidden_size = 32
    vocab_size = 64
    num_layers = 2

    batch = 2
    seq_len = 8
    img_hw = 32        # 32x32 image, 16x16 patches -> 4 patches of dim 768

    key = jax.random.PRNGKey(0)
    k_img, k_cap, k_params = jax.random.split(key, 3)

    images = jax.random.normal(k_img, (batch, 3, img_hw, img_hw), jnp.float32)
    captions = jax.random.randint(k_cap, (seq_len, batch), 0, vocab_size,
                                  dtype=jnp.int32)

    model = CNNtoLSTMPallas(embed_size, hidden_size, vocab_size, num_layers,
                            key=k_params)

    outputs = model(images, captions)
    jax.block_until_ready(outputs)

    assert outputs.shape == (seq_len + 1, batch, vocab_size), outputs.shape
    assert outputs.dtype == jnp.float32
    assert bool(jnp.all(jnp.isfinite(outputs)))
    print("KERNEL_OK")
</pallas_src>

<mosaic_0001>
module attributes {stable_mosaic.version = 11 : i64} {
  func.func @_encoder_kernel(%arg0: i32, %arg1: i32, %arg2: memref<2x4x768xf32, #tpu.memory_space<vmem>>, %arg3: memref<768x128xbf16, #tpu.memory_space<vmem>>, %arg4: memref<1x128xf32, #tpu.memory_space<vmem>>, %arg5: memref<128x128xbf16, #tpu.memory_space<vmem>>, %arg6: memref<1x128xf32, #tpu.memory_space<vmem>>, %arg7: memref<2x128xf32, #tpu.memory_space<vmem>>, %arg8: memref<2x768xf32, #tpu.memory_space<vmem>>) attributes {dimension_semantics = [#tpu.dimension_semantics<parallel>, #tpu.dimension_semantics<arbitrary>], iteration_bounds = array<i64: 1, 1>, scalar_prefetch = 0 : i64, scratch_operands = 1 : i64, tpu.core_type = #tpu.core_type<tc>, window_params = [{transform_indices = @transform_0, window_bounds = array<i64: 2, 4, 768>}, {pipeline_mode = #tpu.pipeline_mode<synchronous>, transform_indices = @transform_1, window_bounds = array<i64: 768, 128>}, {pipeline_mode = #tpu.pipeline_mode<synchronous>, transform_indices = @transform_2, window_bounds = array<i64: 1, 128>}, {pipeline_mode = #tpu.pipeline_mode<synchronous>, transform_indices = @transform_3, window_bounds = array<i64: 128, 128>}, {pipeline_mode = #tpu.pipeline_mode<synchronous>, transform_indices = @transform_4, window_bounds = array<i64: 1, 128>}, {transform_indices = @transform_5, window_bounds = array<i64: 2, 128>}]} {
    %c0_i32 = arith.constant 0 : i32
    %0 = arith.cmpi eq, %arg1, %c0_i32 : i32
    %1 = arith.extui %0 : i1 to i32
    %c0_i32_0 = arith.constant 0 : i32
    %2 = arith.cmpi ne, %1, %c0_i32_0 : i32
    scf.if %2 {
      %cst_9 = arith.constant 0.000000e+00 : f32
      %11 = vector.broadcast %cst_9 : f32 to vector<2x768xf32>
      %c0_10 = arith.constant 0 : index
      %c0_11 = arith.constant 0 : index
      %12 = vector.load %arg8[%c0_10, %c0_11] : memref<2x768xf32, #tpu.memory_space<vmem>>, vector<2x768xf32>
      tpu.vector_store %arg8[%c0_10, %c0_11], %11 {strides = array<i32>} : memref<2x768xf32, #tpu.memory_space<vmem>>, vector<2x768xf32>,
    } else {
    }
    %c0 = arith.constant 0 : index
    %c0_1 = arith.constant 0 : index
    %3 = vector.load %arg8[%c0, %c0_1] : memref<2x768xf32, #tpu.memory_space<vmem>>, vector<2x768xf32>
    %c0_2 = arith.constant 0 : index
    %c0_3 = arith.constant 0 : index
    %c0_4 = arith.constant 0 : index
    %4 = vector.load %arg2[%c0_2, %c0_3, %c0_4] : memref<2x4x768xf32, #tpu.memory_space<vmem>>, vector<2x4x768xf32>
    %cst = arith.constant dense<0.000000e+00> : vector<2x768xf32>
    %5 = vector.multi_reduction <add>, %4, %cst [1] : vector<2x4x768xf32> to vector<2x768xf32>
    %6 = arith.addf %3, %5 : vector<2x768xf32>
    %c0_5 = arith.constant 0 : index
    %c0_6 = arith.constant 0 : index
    %7 = vector.load %arg8[%c0_5, %c0_6] : memref<2x768xf32, #tpu.memory_space<vmem>>, vector<2x768xf32>
    tpu.vector_store %arg8[%c0_5, %c0_6], %6 {strides = array<i32>} : memref<2x768xf32, #tpu.memory_space<vmem>>, vector<2x768xf32>,
    %c0_i32_7 = arith.constant 0 : i32
    %8 = arith.cmpi eq, %arg1, %c0_i32_7 : i32
    %9 = arith.extui %8 : i1 to i32
    %c0_i32_8 = arith.constant 0 : i32
    %10 = arith.cmpi ne, %9, %c0_i32_8 : i32
    scf.if %10 {
      %c0_9 = arith.constant 0 : index
      %c0_10 = arith.constant 0 : index
      %11 = vector.load %arg8[%c0_9, %c0_10] : memref<2x768xf32, #tpu.memory_space<vmem>>, vector<2x768xf32>
      %cst_11 = arith.constant 2.500000e-01 : f32
      %12 = vector.broadcast %cst_11 : f32 to vector<2x768xf32>
      %13 = arith.mulf %11, %12 : vector<2x768xf32>
      %14 = arith.truncf %13 : vector<2x768xf32> to vector<2x768xbf16>
      %c0_12 = arith.constant 0 : index
      %c0_13 = arith.constant 0 : index
      %15 = vector.load %arg3[%c0_12, %c0_13] : memref<768x128xbf16, #tpu.memory_space<vmem>>, vector<768x128xbf16>
      %cst_14 = arith.constant dense<0.000000e+00> : vector<2x128xf32>
      %16 = tpu.matmul %14, %15, %cst_14 {dimension_numbers = #tpu.dot_dimension_numbers<[1], [0], [0], [1], [0, 0, 1, 1], [], []>} : vector<2x768xbf16>, vector<768x128xbf16>, vector<2x128xf32> -> vector<2x128xf32>
      %c0_15 = arith.constant 0 : index
      %c0_16 = arith.constant 0 : index
      %17 = vector.load %arg4[%c0_15, %c0_16] : memref<1x128xf32, #tpu.memory_space<vmem>>, vector<1x128xf32>
      %18 = vector.broadcast %17 : vector<1x128xf32> to vector<2x128xf32>
      %19 = arith.addf %16, %18 : vector<2x128xf32>
      %20 = arith.truncf %19 : vector<2x128xf32> to vector<2x128xbf16>
      %c0_17 = arith.constant 0 : index
      %c0_18 = arith.constant 0 : index
      %21 = vector.load %arg5[%c0_17, %c0_18] : memref<128x128xbf16, #tpu.memory_space<vmem>>, vector<128x128xbf16>
      %cst_19 = arith.constant dense<0.000000e+00> : vector<2x128xf32>
      %22 = tpu.matmul %20, %21, %cst_19 {dimension_numbers = #tpu.dot_dimension_numbers<[1], [0], [0], [1], [0, 0, 1, 1], [], []>} : vector<2x128xbf16>, vector<128x128xbf16>, vector<2x128xf32> -> vector<2x128xf32>
      %c0_20 = arith.constant 0 : index
      %c0_21 = arith.constant 0 : index
      %23 = vector.load %arg6[%c0_20, %c0_21] : memref<1x128xf32, #tpu.memory_space<vmem>>, vector<1x128xf32>
      %24 = vector.broadcast %23 : vector<1x128xf32> to vector<2x128xf32>
      %25 = arith.addf %22, %24 : vector<2x128xf32>
      %cst_22 = arith.constant 0.000000e+00 : f32
      %26 = vector.broadcast %cst_22 : f32 to vector<2x128xf32>
      %27 = arith.maximumf %25, %26 : vector<2x128xf32>
      %c0_23 = arith.constant 0 : index
      %c0_24 = arith.constant 0 : index
      %28 = vector.load %arg7[%c0_23, %c0_24] : memref<2x128xf32, #tpu.memory_space<vmem>>, vector<2x128xf32>
      tpu.vector_store %arg7[%c0_23, %c0_24], %27 {strides = array<i32>} : memref<2x128xf32, #tpu.memory_space<vmem>>, vector<2x128xf32>,
    } else {
    }
    return
  }
  func.func @transform_0(%arg0: i32, %arg1: i32) -> (i32, i32, i32) {
    %c0_i32 = arith.constant 0 : i32
    %c0_i32_0 = arith.constant 0 : i32
    return %arg0, %arg1, %c0_i32 : i32, i32, i32
  }
  func.func @transform_1(%arg0: i32, %arg1: i32) -> (i32, i32) {
    %c0_i32 = arith.constant 0 : i32
    %c0_i32_0 = arith.constant 0 : i32
    %c0_i32_1 = arith.constant 0 : i32
    return %c0_i32, %c0_i32_0 : i32, i32
  }
  func.func @transform_2(%arg0: i32, %arg1: i32) -> (i32, i32) {
    %c0_i32 = arith.constant 0 : i32
    %c0_i32_0 = arith.constant 0 : i32
    %c0_i32_1 = arith.constant 0 : i32
    return %c0_i32, %c0_i32_0 : i32, i32
  }
  func.func @transform_3(%arg0: i32, %arg1: i32) -> (i32, i32) {
    %c0_i32 = arith.constant 0 : i32
    %c0_i32_0 = arith.constant 0 : i32
    %c0_i32_1 = arith.constant 0 : i32
    return %c0_i32, %c0_i32_0 : i32, i32
  }
  func.func @transform_4(%arg0: i32, %arg1: i32) -> (i32, i32) {
    %c0_i32 = arith.constant 0 : i32
    %c0_i32_0 = arith.constant 0 : i32
    %c0_i32_1 = arith.constant 0 : i32
    return %c0_i32, %c0_i32_0 : i32, i32
  }
  func.func @transform_5(%arg0: i32, %arg1: i32) -> (i32, i32) {
    %c0_i32 = arith.constant 0 : i32
    %c0_i32_0 = arith.constant 0 : i32
    return %arg0, %c0_i32 : i32, i32
  }
}

</mosaic_0001>

<llo_original>
// kernel: tpu_custom_call.1
$region0: #{tpu_custom_call.1}
  #allocation0 [shape = 'u32[]', space=smem, size = 0x4, offset = 0x4, fixed_abs, tag = 'smem constant byte address 0x4 - core index']
  #allocation1 [shape = 'u32[144,128]{1,0:T(1,128)}', space=vmem, size = 0x12000, scoped, tag = 'internal scratch']
  #allocation2 [shape = 'f32[2,768]{1,0:T(2,128)}', space=vmem, size = 0x1800, scoped, tag = 'scratch operand']
  %s0 = inlined_call_operand.hbm [shape: f32[2,4,768], index: 0, kind: input, shape index: {}]
  %s1 = inlined_call_operand.hbm [shape: bf16[768,128], index: 1, kind: input, shape index: {}]
  %s2 = inlined_call_operand.vmem [shape: f32[1,128], index: 2, kind: input, shape index: {}]
  %s3 = inlined_call_operand.hbm [shape: bf16[128,128], index: 3, kind: input, shape index: {}]
  %s4 = inlined_call_operand.vmem [shape: f32[1,128], index: 4, kind: input, shape index: {}]
  %s5 = inlined_call_operand.hbm [shape: f32[2,128], index: 5, kind: output, shape index: {}]
  %s6 = sld [smem:[#allocation0]]
  $region50: #{tpu_custom_call.1} parent=0
    _
  %s8 = ssub.s32 1, %s6
  %s9 = scalar_select 0, %s8, %s6
  $region1: #{tpu_custom_call.1} parent=0
    #allocation3 [shape = 'u8[24576]{0}', space=vmem, size = 0x6000, scoped, tag = 'input window, operand 0, single buffered']
    #allocation4 [shape = 's32[1]{0}', space=sflag, size = 0x4, scoped, tag = 'scoped memory for tpu_custom_call.1']
    #allocation5 [shape = 's32[1]{0}', space=sflag, size = 0x4, scoped, tag = 'scoped memory for tpu_custom_call.1']
    #allocation6 [shape = 'u8[196608]{0}', space=vmem, size = 0x30000, scoped, tag = 'input window, operand 1, single buffered']
    #allocation7 [shape = 's32[1]{0}', space=sflag, size = 0x4, scoped, tag = 'scoped memory for tpu_custom_call.1']
    #allocation8 [shape = 'u8[32768]{0}', space=vmem, size = 0x8000, scoped, tag = 'input window, operand 3, single buffered']
    #allocation9 [shape = 'u8[1024]{0}', space=vmem, size = 0x400, scoped, tag = 'output window, operand 0, single buffered']
    %10 = vsyncpa [#allocation4], 0
    %11 = vsyncpa [#allocation7], 0
    %12 = vsyncpa [#allocation5], 0
    // Predicated region
    $region2: #{tpu_custom_call.1} parent=1 // pred_check
      _
    $region3: #{tpu_custom_call.1} parent=1 // pred_check_branch
      %14 = sbr.rel (0) target = $region5
    $region4: #{tpu_custom_call.1} parent=1 // pred_region
      %s16 = ssub.s32 768, 768
      %17 = vsyncadd [#allocation4], %s16
      %s18 = sshll.u32 [#allocation3], 4
      %s19 = int_to_ptr.vmem [resolvable:$true] %s18
      %24 = dma.hbm_to_vmem [thread:$0]  %s0, 768, %s19, [#allocation4], 384, 384, 24
    $region5: #{tpu_custom_call.1} parent=1 // pred_fallthru
      _
    // Predicated region
    $region6: #{tpu_custom_call.1} parent=1 // pred_check
      _
    $region7: #{tpu_custom_call.1} parent=1 // pred_check_branch
      %26 = sbr.rel (0) target = $region9
    $region8: #{tpu_custom_call.1} parent=1 // pred_region
      %s28 = ssub.s32 6144, 6144
      %29 = vsyncadd [#allocation7], %s28
      %s30 = sshll.u32 [#allocation6], 4
      %s31 = int_to_ptr.vmem [resolvable:$true] %s30
      %36 = dma.hbm_to_vmem [thread:$0]  %s1, 6144, %s31, [#allocation7], 64, 64, 4
    $region9: #{tpu_custom_call.1} parent=1 // pred_fallthru
      _
    // Predicated region
    $region10: #{tpu_custom_call.1} parent=1 // pred_check
      _
    $region11: #{tpu_custom_call.1} parent=1 // pred_check_branch
      %38 = sbr.rel (0) target = $region13
    $region12: #{tpu_custom_call.1} parent=1 // pred_region
      _
    $region13: #{tpu_custom_call.1} parent=1 // pred_fallthru
      _
    // Predicated region
    $region14: #{tpu_custom_call.1} parent=1 // pred_check
      _
    $region15: #{tpu_custom_call.1} parent=1 // pred_check_branch
      %40 = sbr.rel (0) target = $region17
    $region16: #{tpu_custom_call.1} parent=1 // pred_region
      %s42 = ssub.s32 1024, 1024
      %43 = vsyncadd [#allocation7], %s42
      %s44 = sshll.u32 [#allocation8], 4
      %s45 = int_to_ptr.vmem [resolvable:$true] %s44
      %50 = dma.hbm_to_vmem [thread:$0]  %s3, 1024, %s45, [#allocation7], 64, 64, 4
    $region17: #{tpu_custom_call.1} parent=1 // pred_fallthru
      _
    // Predicated region
    $region18: #{tpu_custom_call.1} parent=1 // pred_check
      _
    $region19: #{tpu_custom_call.1} parent=1 // pred_check_branch
      %52 = sbr.rel (0) target = $region21
    $region20: #{tpu_custom_call.1} parent=1 // pred_region
      _
    $region21: #{tpu_custom_call.1} parent=1 // pred_fallthru
      _
    // Predicated region
    $region22: #{tpu_custom_call.1} parent=1 // pred_check
      _
    $region23: #{tpu_custom_call.1} parent=1 // pred_check_branch
      %54 = sbr.rel (0) target = $region25
    $region24: #{tpu_custom_call.1} parent=1 // pred_region
      %55 = dma.done [#allocation4], 768
    $region25: #{tpu_custom_call.1} parent=1 // pred_fallthru
      _
    // Predicated region
    $region26: #{tpu_custom_call.1} parent=1 // pred_check
      _
    $region27: #{tpu_custom_call.1} parent=1 // pred_check_branch
      %57 = sbr.rel (0) target = $region29
    $region28: #{tpu_custom_call.1} parent=1 // pred_region
      %58 = dma.done [#allocation7], 6144
    $region29: #{tpu_custom_call.1} parent=1 // pred_fallthru
      _
    // Predicated region
    $region30: #{tpu_custom_call.1} parent=1 // pred_check
      _
    $region31: #{tpu_custom_call.1} parent=1 // pred_check_branch
      %60 = sbr.rel (0) target = $region33
    $region32: #{tpu_custom_call.1} parent=1 // pred_region
      %61 = dma.done [#allocation7], 1024
    $region33: #{tpu_custom_call.1} parent=1 // pred_fallthru
      _
    %p63 = scmp.eq.s32.totalorder 0, 0
    // Predicated region
    $region34: #{tpu_custom_call.1} parent=1 // pred_check
      %p64 = pneg %p63
    $region35: #{tpu_custom_call.1} parent=1 // pred_check_branch
      %66 = sbr.rel (%p64) target = $region37
    $region36: #{tpu_custom_call.1} parent=1 // pred_region
      %67 = vst [vmem:[#allocation2] sm:$0xff] 0.0
      %68 = vst [vmem:[#allocation2 + $0x8] sm:$0xf] 0.0
    $region37: #{tpu_custom_call.1} parent=1 // pred_fallthru
      _
    %v69 = vld [vmem:[#allocation2] sm:$0xff]
    %v70 = vld [vmem:[#allocation2 + $0x8] sm:$0xf]
    %v71 = vld [vmem:[#allocation3] sm:$0xff]
    %v72 = vld [vmem:[#allocation3 + $0x8] sm:$0xff]
    %v73 = vld [vmem:[#allocation3 + $0x10] sm:$0xff]
    %v74 = vld [vmem:[#allocation3 + $0x18] sm:$0xff]
    %v75 = vld [vmem:[#allocation3 + $0x20] sm:$0xff]
    %v76 = vld [vmem:[#allocation3 + $0x28] sm:$0xff]
    %v83 = vcombine.high %v71, %v71
    %v84 = vcombine.high %v72, %v72
    %v85 = vcombine.high %v73, %v73
    %v86 = vcombine.high %v74, %v74
    %v87 = vcombine.high %v75, %v75
    %v88 = vcombine.high %v76, %v76
    %vm95 = vcmask 1043456
    %v96 = vsel %vm95, %v71, 0.0
    %v97 = vrot.slane %v96, 4
    %v98 = vadd.f32 %v96, %v97
    %v99 = vrot.slane %v98, 2
    %v100 = vadd.f32 %v98, %v99
    %v101 = vrot.slane %v100, 1
    %v102 = vadd.f32 %v100, %v101
    %v103 = vsel %vm95, %v83, 0.0
    %v104 = vrot.slane %v103, 4
    %v105 = vadd.f32 %v103, %v104
    %v106 = vrot.slane %v105, 2
    %v107 = vadd.f32 %v105, %v106
    %v108 = vrot.slane %v107, 1
    %v109 = vadd.f32 %v107, %v108
    %v110 = vsel %vm95, %v72, 0.0
    %v111 = vrot.slane %v110, 4
    %v112 = vadd.f32 %v110, %v111
    %v113 = vrot.slane %v112, 2
    %v114 = vadd.f32 %v112, %v113
    %v115 = vrot.slane %v114, 1
    %v116 = vadd.f32 %v114, %v115
    %v117 = vsel %vm95, %v84, 0.0
    %v118 = vrot.slane %v117, 4
    %v119 = vadd.f32 %v117, %v118
    %v120 = vrot.slane %v119, 2
    %v121 = vadd.f32 %v119, %v120
    %v122 = vrot.slane %v121, 1
    %v123 = vadd.f32 %v121, %v122
    %v124 = vsel %vm95, %v73, 0.0
    %v125 = vrot.slane %v124, 4
    %v126 = vadd.f32 %v124, %v125
    %v127 = vrot.slane %v126, 2
    %v128 = vadd.f32 %v126, %v127
    %v129 = vrot.slane %v128, 1
    %v130 = vadd.f32 %v128, %v129
    %v131 = vsel %vm95, %v85, 0.0
    %v132 = vrot.slane %v131, 4
    %v133 = vadd.f32 %v131, %v132
    %v134 = vrot.slane %v133, 2
    %v135 = vadd.f32 %v133, %v134
    %v136 = vrot.slane %v135, 1
    %v137 = vadd.f32 %v135, %v136
    %v138 = vsel %vm95, %v74, 0.0
    %v139 = vrot.slane %v138, 4
    %v140 = vadd.f32 %v138, %v139
    %v141 = vrot.slane %v140, 2
    %v142 = vadd.f32 %v140, %v141
    %v143 = vrot.slane %v142, 1
    %v144 = vadd.f32 %v142, %v143
    %v145 = vsel %vm95, %v86, 0.0
    %v146 = vrot.slane %v145, 4
    %v147 = vadd.f32 %v145, %v146
    %v148 = vrot.slane %v147, 2
    %v149 = vadd.f32 %v147, %v148
    %v150 = vrot.slane %v149, 1
    %v151 = vadd.f32 %v149, %v150
    %v152 = vsel %vm95, %v75, 0.0
    %v153 = vrot.slane %v152, 4
    %v154 = vadd.f32 %v152, %v153
    %v155 = vrot.slane %v154, 2
    %v156 = vadd.f32 %v154, %v155
    %v157 = vrot.slane %v156, 1
    %v158 = vadd.f32 %v156, %v157
    %v159 = vsel %vm95, %v87, 0.0
    %v160 = vrot.slane %v159, 4
    %v161 = vadd.f32 %v159, %v160
    %v162 = vrot.slane %v161, 2
    %v163 = vadd.f32 %v161, %v162
    %v164 = vrot.slane %v163, 1
    %v165 = vadd.f32 %v163, %v164
    %v166 = vsel %vm95, %v76, 0.0
    %v167 = vrot.slane %v166, 4
    %v168 = vadd.f32 %v166, %v167
    %v169 = vrot.slane %v168, 2
    %v170 = vadd.f32 %v168, %v169
    %v171 = vrot.slane %v170, 1
    %v172 = vadd.f32 %v170, %v171
    %v173 = vsel %vm95, %v88, 0.0
    %v174 = vrot.slane %v173, 4
    %v175 = vadd.f32 %v173, %v174
    %v176 = vrot.slane %v175, 2
    %v177 = vadd.f32 %v175, %v176
    %v178 = vrot.slane %v177, 1
    %v179 = vadd.f32 %v177, %v178
    %v192 = vcombine.low %v102, %v109
    %v193 = vcombine.low %v116, %v123
    %v195 = vunpack.c.l.s4 1983009808
    %v196 = vunpack.c.0.s8 %v195
    %v197 = vlaneseq
    %v198 = vshrl.u32 %v197, 7
    %v199 = vsub.s32 %v196, %v198
    %v200 = vrot.slane %v192, %v199
    %v202 = vunpack.c.l.s4 1983009808
    %v203 = vunpack.c.0.s8 %v202
    %v204 = vlaneseq
    %v205 = vshrl.u32 %v204, 7
    %v206 = vsub.s32 %v203, %v205
    %v207 = vrot.slane %v193, %v206
    %v208 = vcombine.low %v200, %v207
    %v209 = vcombine.low %v130, %v137
    %v211 = vunpack.c.l.s4 1983009808
    %v212 = vunpack.c.0.s8 %v211
    %v213 = vlaneseq
    %v214 = vshrl.u32 %v213, 7
    %v215 = vsub.s32 %v212, %v214
    %v216 = vrot.slane %v209, %v215
    %v217 = vcombine.low %v144, %v151
    %v218 = vcombine.low %v158, %v165
    %v220 = vunpack.c.l.s4 1983009808
    %v221 = vunpack.c.0.s8 %v220
    %v222 = vlaneseq
    %v223 = vshrl.u32 %v222, 7
    %v224 = vsub.s32 %v221, %v223
    %v225 = vrot.slane %v217, %v224
    %v227 = vunpack.c.l.s4 1983009808
    %v228 = vunpack.c.0.s8 %v227
    %v229 = vlaneseq
    %v230 = vshrl.u32 %v229, 7
    %v231 = vsub.s32 %v228, %v230
    %v232 = vrot.slane %v218, %v231
    %v233 = vcombine.low %v225, %v232
    %v234 = vcombine.low %v172, %v179
    %v236 = vunpack.c.l.s4 1983009808
    %v237 = vunpack.c.0.s8 %v236
    %v238 = vlaneseq
    %v239 = vshrl.u32 %v238, 7
    %v240 = vsub.s32 %v237, %v239
    %v241 = vrot.slane %v234, %v240
    %vm242 = vcmask 1044484
    %v243 = vsel %vm242, %v208, %v208
    %vm244 = vcmask 1046534
    %v245 = vsel %vm244, %v208, %v243
    %v246 = vrot.slane %v233, 7
    %vm247 = vcmask 1041409
    %v248 = vsel %vm247, %v246, %v245
    %vm249 = vcmask 1043459
    %v250 = vsel %vm249, %v246, %v248
    %vm251 = vcmask 1045509
    %v252 = vsel %vm251, %v246, %v250
    %vm253 = vcmask 1047559
    %v254 = vsel %vm253, %v246, %v252
    %v255 = vsel %vm242, %v216, %v216
    %v256 = vsel %vm244, %v216, %v255
    %v257 = vrot.slane %v241, 7
    %v258 = vsel %vm247, %v257, %v256
    %v259 = vsel %vm249, %v257, %v258
    %v260 = vsel %vm251, %v257, %v259
    %v261 = vsel %vm253, %v257, %v260
    %v264 = vadd.f32 %v69, %v254
    %v265 = vadd.f32 %v70, %v261
    %266 = vst [vmem:[#allocation2] sm:$0xff] %v264
    %267 = vst [vmem:[#allocation2 + $0x8] sm:$0xf] %v265
    // Predicated region
    $region38: #{tpu_custom_call.1} parent=1 // pred_check
      %p268 = pneg %p63
    $region39: #{tpu_custom_call.1} parent=1 // pred_check_branch
      %270 = sbr.rel (%p268) target = $region41
    $region40: #{tpu_custom_call.1} parent=1 // pred_region
      %v271 = vld [vmem:[#allocation2] sm:$0xff]
      %v272 = vld [vmem:[#allocation2 + $0x8] sm:$0xf]
      %v273 = vmul.f32 %v271, 0.25
      %v274 = vmul.f32 %v272, 0.25
      %v277 = vcombine.high %v273, %v273
      %v279 = vunpack.c.l.s4 1983009808
      %v280 = vunpack.c.0.s8 %v279
      %v281 = vlaneseq
      %v282 = vshrl.u32 %v281, 7
      %v283 = vsub.s32 %v280, %v282
      %v284 = vrot.slane %v273, %v283
      %v286 = vunpack.c.l.s4 1983009808
      %v287 = vunpack.c.0.s8 %v286
      %v288 = vlaneseq
      %v289 = vshrl.u32 %v288, 7
      %v290 = vsub.s32 %v287, %v289
      %v291 = vrot.slane %v277, %v290
      %v292 = vcombine.high %v284, %v284
      %v293 = vcombine.high %v291, %v291
      %v295 = vunpack.c.l.s4 1983009808
      %v296 = vunpack.c.0.s8 %v295
      %v297 = vlaneseq
      %v298 = vshrl.u32 %v297, 7
      %v299 = vsub.s32 %v296, %v298
      %v300 = vrot.slane %v274, %v299
      %v301 = vcombine.high %v300, %v300
      %v308 = vpack.c.bf16 %v284, %v284
      %v309 = vpack.c.bf16 %v292, %v292
      %v310 = vpack.c.bf16 %v291, %v291
      %v311 = vpack.c.bf16 %v293, %v293
      %v312 = vpack.c.bf16 %v300, %v300
      %v313 = vpack.c.bf16 %v301, %v301
      %v314 = vld [vmem:[#allocation6] sm:$0xf]
      %v315 = vld [vmem:[#allocation6 + $0x4] sm:$0xf]
      %v316 = vld [vmem:[#allocation6 + $0x8] sm:$0xf]
      %v317 = vld [vmem:[#allocation6 + $0xc] sm:$0xf]
      %v318 = vld [vmem:[#allocation6 + $0x10] sm:$0xf]
      %v319 = vld [vmem:[#allocation6 + $0x14] sm:$0xf]
      %v320 = vld [vmem:[#allocation6 + $0x18] sm:$0xf]
      %v321 = vld [vmem:[#allocation6 + $0x1c] sm:$0xf]
      %v322 = vld [vmem:[#allocation6 + $0x20] sm:$0xf]
      %v323 = vld [vmem:[#allocation6 + $0x24] sm:$0xf]
      %v324 = vld [vmem:[#allocation6 + $0x28] sm:$0xf]
      %v325 = vld [vmem:[#allocation6 + $0x2c] sm:$0xf]
      %v326 = vld [vmem:[#allocation6 + $0x30] sm:$0xf]
      %v327 = vld [vmem:[#allocation6 + $0x34] sm:$0xf]
      %v328 = vld [vmem:[#allocation6 + $0x38] sm:$0xf]
      %v329 = vld [vmem:[#allocation6 + $0x3c] sm:$0xf]
      %v330 = vld [vmem:[#allocation6 + $0x40] sm:$0xf]
      %v331 = vld [vmem:[#allocation6 + $0x44] sm:$0xf]
      %v332 = vld [vmem:[#allocation6 + $0x48] sm:$0xf]
      %v333 = vld [vmem:[#allocation6 + $0x4c] sm:$0xf]
      %v334 = vld [vmem:[#allocation6 + $0x50] sm:$0xf]
      %v335 = vld [vmem:[#allocation6 + $0x54] sm:$0xf]
      %v336 = vld [vmem:[#allocation6 + $0x58] sm:$0xf]
      %v337 = vld [vmem:[#allocation6 + $0x5c] sm:$0xf]
      %v338 = vld [vmem:[#allocation6 + $0x60] sm:$0xf]
      %v339 = vld [vmem:[#allocation6 + $0x64] sm:$0xf]
      %v340 = vld [vmem:[#allocation6 + $0x68] sm:$0xf]
      %v341 = vld [vmem:[#allocation6 + $0x6c] sm:$0xf]
      %v342 = vld [vmem:[#allocation6 + $0x70] sm:$0xf]
      %v343 = vld [vmem:[#allocation6 + $0x74] sm:$0xf]
      %v344 = vld [vmem:[#allocation6 + $0x78] sm:$0xf]
      %v345 = vld [vmem:[#allocation6 + $0x7c] sm:$0xf]
      %v346 = vld [vmem:[#allocation6 + $0x80] sm:$0xf]
      %v347 = vld [vmem:[#allocation6 + $0x84] sm:$0xf]
      %v348 = vld [vmem:[#allocation6 + $0x88] sm:$0xf]
      %v349 = vld [vmem:[#allocation6 + $0x8c] sm:$0xf]
      %v350 = vld [vmem:[#allocation6 + $0x90] sm:$0xf]
      %v351 = vld [vmem:[#allocation6 + $0x94] sm:$0xf]
      %v352 = vld [vmem:[#allocation6 + $0x98] sm:$0xf]
      %v353 = vld [vmem:[#allocation6 + $0x9c] sm:$0xf]
      %v354 = vld [vmem:[#allocation6 + $0xa0] sm:$0xf]
      %v355 = vld [vmem:[#allocation6 + $0xa4] sm:$0xf]
      %v356 = vld [vmem:[#allocation6 + $0xa8] sm:$0xf]
      %v357 = vld [vmem:[#allocation6 + $0xac] sm:$0xf]
      %v358 = vld [vmem:[#allocation6 + $0xb0] sm:$0xf]
      %v359 = vld [vmem:[#allocation6 + $0xb4] sm:$0xf]
      %v360 = vld [vmem:[#allocation6 + $0xb8] sm:$0xf]
      %v361 = vld [vmem:[#allocation6 + $0xbc] sm:$0xf]
      %v362 = vld [vmem:[#allocation6 + $0xc0] sm:$0xf]
      %v363 = vld [vmem:[#allocation6 + $0xc4] sm:$0xf]
      %v364 = vld [vmem:[#allocation6 + $0xc8] sm:$0xf]
      %v365 = vld [vmem:[#allocation6 + $0xcc] sm:$0xf]
      %v366 = vld [vmem:[#allocation6 + $0xd0] sm:$0xf]
      %v367 = vld [vmem:[#allocation6 + $0xd4] sm:$0xf]
      %v368 = vld [vmem:[#allocation6 + $0xd8] sm:$0xf]
      %v369 = vld [vmem:[#allocation6 + $0xdc] sm:$0xf]
      %v370 = vld [vmem:[#allocation6 + $0xe0] sm:$0xf]
      %v371 = vld [vmem:[#allocation6 + $0xe4] sm:$0xf]
      %v372 = vld [vmem:[#allocation6 + $0xe8] sm:$0xf]
      %v373 = vld [vmem:[#allocation6 + $0xec] sm:$0xf]
      %v374 = vld [vmem:[#allocation6 + $0xf0] sm:$0xf]
      %v375 = vld [vmem:[#allocation6 + $0xf4] sm:$0xf]
      %v376 = vld [vmem:[#allocation6 + $0xf8] sm:$0xf]
      %v377 = vld [vmem:[#allocation6 + $0xfc] sm:$0xf]
      %v378 = vld [vmem:[#allocation6 + $0x100] sm:$0xf]
      %v379 = vld [vmem:[#allocation6 + $0x104] sm:$0xf]
      %v380 = vld [vmem:[#allocation6 + $0x108] sm:$0xf]
      %v381 = vld [vmem:[#allocation6 + $0x10c] sm:$0xf]
      %v382 = vld [vmem:[#allocation6 + $0x110] sm:$0xf]
      %v383 = vld [vmem:[#allocation6 + $0x114] sm:$0xf]
      %v384 = vld [vmem:[#allocation6 + $0x118] sm:$0xf]
      %v385 = vld [vmem:[#allocation6 + $0x11c] sm:$0xf]
      %v386 = vld [vmem:[#allocation6 + $0x120] sm:$0xf]
      %v387 = vld [vmem:[#allocation6 + $0x124] sm:$0xf]
      %v388 = vld [vmem:[#allocation6 + $0x128] sm:$0xf]
      %v389 = vld [vmem:[#allocation6 + $0x12c] sm:$0xf]
      %v390 = vld [vmem:[#allocation6 + $0x130] sm:$0xf]
      %v391 = vld [vmem:[#allocation6 + $0x134] sm:$0xf]
      %v392 = vld [vmem:[#allocation6 + $0x138] sm:$0xf]
      %v393 = vld [vmem:[#allocation6 + $0x13c] sm:$0xf]
      %v394 = vld [vmem:[#allocation6 + $0x140] sm:$0xf]
      %v395 = vld [vmem:[#allocation6 + $0x144] sm:$0xf]
      %v396 = vld [vmem:[#allocation6 + $0x148] sm:$0xf]
      %v397 = vld [vmem:[#allocation6 + $0x14c] sm:$0xf]
      %v398 = vld [vmem:[#allocation6 + $0x150] sm:$0xf]
      %v399 = vld [vmem:[#allocation6 + $0x154] sm:$0xf]
      %v400 = vld [vmem:[#allocation6 + $0x158] sm:$0xf]
      %v401 = vld [vmem:[#allocation6 + $0x15c] sm:$0xf]
      %v402 = vld [vmem:[#allocation6 + $0x160] sm:$0xf]
      %v403 = vld [vmem:[#allocation6 + $0x164] sm:$0xf]
      %v404 = vld [vmem:[#allocation6 + $0x168] sm:$0xf]
      %v405 = vld [vmem:[#allocation6 + $0x16c] sm:$0xf]
      %v406 = vld [vmem:[#allocation6 + $0x170] sm:$0xf]
      %v407 = vld [vmem:[#allocation6 + $0x174] sm:$0xf]
      %v408 = vld [vmem:[#allocation6 + $0x178] sm:$0xf]
      %v409 = vld [vmem:[#allocation6 + $0x17c] sm:$0xf]
      %v410 = vld [vmem:[%s2] sm:$0x1]
      %v412 = vlaneseq
      %v413 = vshrl.u32 %v412, 7
      %v414 = vsub.s32 0, %v413
      %v415 = vrot.slane %v410, %v414
      %v513 = vunpack.c.l.b16 %v314
      %v514 = vunpack.c.l.b16 %v315
      %v515 = vunpack.c.l.b16 %v316
      %v516 = vunpack.c.l.b16 %v317
      %v517 = vunpack.c.l.b16 %v318
      %v518 = vunpack.c.l.b16 %v319
      %v519 = vunpack.c.l.b16 %v320
      %v520 = vunpack.c.l.b16 %v321
      %v521 = vunpack.c.l.b16 %v322
      %v522 = vunpack.c.l.b16 %v323
      %v523 = vunpack.c.l.b16 %v324
      %v524 = vunpack.c.l.b16 %v325
      %v525 = vunpack.c.l.b16 %v326
      %v526 = vunpack.c.l.b16 %v327
      %v527 = vunpack.c.l.b16 %v328
      %v528 = vunpack.c.l.b16 %v329
      %v529 = vunpack.c.l.b16 %v330
      %v530 = vunpack.c.l.b16 %v331
      %v531 = vunpack.c.l.b16 %v332
      %v532 = vunpack.c.l.b16 %v333
      %v533 = vunpack.c.l.b16 %v334
      %v534 = vunpack.c.l.b16 %v335
      %v535 = vunpack.c.l.b16 %v336
      %v536 = vunpack.c.l.b16 %v337
      %v537 = vunpack.c.l.b16 %v338
      %v538 = vunpack.c.l.b16 %v339
      %v539 = vunpack.c.l.b16 %v340
      %v540 = vunpack.c.l.b16 %v341
      %v541 = vunpack.c.l.b16 %v342
      %v542 = vunpack.c.l.b16 %v343
      %v543 = vunpack.c.l.b16 %v344
      %v544 = vunpack.c.l.b16 %v345
      %v545 = vunpack.c.l.b16 %v346
      %v546 = vunpack.c.l.b16 %v347
      %v547 = vunpack.c.l.b16 %v348
      %v548 = vunpack.c.l.b16 %v349
      %v549 = vunpack.c.l.b16 %v350
      %v550 = vunpack.c.l.b16 %v351
      %v551 = vunpack.c.l.b16 %v352
      %v552 = vunpack.c.l.b16 %v353
      %v553 = vunpack.c.l.b16 %v354
      %v554 = vunpack.c.l.b16 %v355
      %v555 = vunpack.c.l.b16 %v356
      %v556 = vunpack.c.l.b16 %v357
      %v557 = vunpack.c.l.b16 %v358
      %v558 = vunpack.c.l.b16 %v359
      %v559 = vunpack.c.l.b16 %v360
      %v560 = vunpack.c.l.b16 %v361
      %v561 = vunpack.c.l.b16 %v362
      %v562 = vunpack.c.l.b16 %v363
      %v563 = vunpack.c.l.b16 %v364
      %v564 = vunpack.c.l.b16 %v365
      %v565 = vunpack.c.l.b16 %v366
      %v566 = vunpack.c.l.b16 %v367
      %v567 = vunpack.c.l.b16 %v368
      %v568 = vunpack.c.l.b16 %v369
      %v569 = vunpack.c.l.b16 %v370
      %v570 = vunpack.c.l.b16 %v371
      %v571 = vunpack.c.l.b16 %v372
      %v572 = vunpack.c.l.b16 %v373
      %v573 = vunpack.c.l.b16 %v374
      %v574 = vunpack.c.l.b16 %v375
      %v575 = vunpack.c.l.b16 %v376
      %v576 = vunpack.c.l.b16 %v377
      %v577 = vunpack.c.l.b16 %v378
      %v578 = vunpack.c.l.b16 %v379
      %v579 = vunpack.c.l.b16 %v380
      %v580 = vunpack.c.l.b16 %v381
      %v581 = vunpack.c.l.b16 %v382
      %v582 = vunpack.c.l.b16 %v383
      %v583 = vunpack.c.l.b16 %v384
      %v584 = vunpack.c.l.b16 %v385
      %v585 = vunpack.c.l.b16 %v386
      %v586 = vunpack.c.l.b16 %v387
      %v587 = vunpack.c.l.b16 %v388
      %v588 = vunpack.c.l.b16 %v389
      %v589 = vunpack.c.l.b16 %v390
      %v590 = vunpack.c.l.b16 %v391
      %v591 = vunpack.c.l.b16 %v392
      %v592 = vunpack.c.l.b16 %v393
      %v593 = vunpack.c.l.b16 %v394
      %v594 = vunpack.c.l.b16 %v395
      %v595 = vunpack.c.l.b16 %v396
      %v596 = vunpack.c.l.b16 %v397
      %v597 = vunpack.c.l.b16 %v398
      %v598 = vunpack.c.l.b16 %v399
      %v599 = vunpack.c.l.b16 %v400
      %v600 = vunpack.c.l.b16 %v401
      %v601 = vunpack.c.l.b16 %v402
      %v602 = vunpack.c.l.b16 %v403
      %v603 = vunpack.c.l.b16 %v404
      %v604 = vunpack.c.l.b16 %v405
      %v605 = vunpack.c.l.b16 %v406
      %v606 = vunpack.c.l.b16 %v407
      %v607 = vunpack.c.l.b16 %v408
      %v608 = vunpack.c.l.b16 %v409
      %v609 = vpack.c.b16 %v514, %v513
      %v610 = vpack.c.b16 %v516, %v515
      %v611 = vpack.c.b16 %v518, %v517
      %v612 = vpack.c.b16 %v520, %v519
      %v613 = vpack.c.b16 %v522, %v521
      %v614 = vpack.c.b16 %v524, %v523
      %v615 = vpack.c.b16 %v526, %v525
      %v616 = vpack.c.b16 %v528, %v527
      %v617 = vpack.c.b16 %v530, %v529
      %v618 = vpack.c.b16 %v532, %v531
      %v619 = vpack.c.b16 %v534, %v533
      %v620 = vpack.c.b16 %v536, %v535
      %v621 = vpack.c.b16 %v538, %v537
      %v622 = vpack.c.b16 %v540, %v539
      %v623 = vpack.c.b16 %v542, %v541
      %v624 = vpack.c.b16 %v544, %v543
      %v625 = vpack.c.b16 %v546, %v545
      %v626 = vpack.c.b16 %v548, %v547
      %v627 = vpack.c.b16 %v550, %v549
      %v628 = vpack.c.b16 %v552, %v551
      %v629 = vpack.c.b16 %v554, %v553
      %v630 = vpack.c.b16 %v556, %v555
      %v631 = vpack.c.b16 %v558, %v557
      %v632 = vpack.c.b16 %v560, %v559
      %v633 = vpack.c.b16 %v562, %v561
      %v634 = vpack.c.b16 %v564, %v563
      %v635 = vpack.c.b16 %v566, %v565
      %v636 = vpack.c.b16 %v568, %v567
      %v637 = vpack.c.b16 %v570, %v569
      %v638 = vpack.c.b16 %v572, %v571
      %v639 = vpack.c.b16 %v574, %v573
      %v640 = vpack.c.b16 %v576, %v575
      %v641 = vpack.c.b16 %v578, %v577
      %v642 = vpack.c.b16 %v580, %v579
      %v643 = vpack.c.b16 %v582, %v581
      %v644 = vpack.c.b16 %v584, %v583
      %v645 = vpack.c.b16 %v586, %v585
      %v646 = vpack.c.b16 %v588, %v587
      %v647 = vpack.c.b16 %v590, %v589
      %v648 = vpack.c.b16 %v592, %v591
      %v649 = vpack.c.b16 %v594, %v593
      %v650 = vpack.c.b16 %v596, %v595
      %v651 = vpack.c.b16 %v598, %v597
      %v652 = vpack.c.b16 %v600, %v599
      %v653 = vpack.c.b16 %v602, %v601
      %v654 = vpack.c.b16 %v604, %v603
      %v655 = vpack.c.b16 %v606, %v605
      %v656 = vpack.c.b16 %v608, %v607
      %705 = vmatprep.subr.bf16.mxu0 0
      %706 = vmatpush1.bf16.msra.mxu0 %v616
      %707 = vmatprep.subr.bf16.mxu0 0
      %708 = vmatpush1.bf16.msra.mxu0 %v615
      %709 = vmatprep.subr.bf16.mxu0 0
      %710 = vmatpush1.bf16.msra.mxu0 %v614
      %711 = vmatprep.subr.bf16.mxu0 0
      %712 = vmatpush1.bf16.msra.mxu0 %v613
      %713 = vmatprep.subr.bf16.mxu0 0
      %714 = vmatpush1.bf16.msra.mxu0 %v612
      %715 = vmatprep.subr.bf16.mxu0 0
      %716 = vmatpush1.bf16.msra.mxu0 %v611
      %717 = vmatprep.subr.bf16.mxu0 0
      %718 = vmatpush1.bf16.msra.mxu0 %v610
      %719 = vmatprep.subr.bf16.mxu0 0
      %720 = vmatpush1.bf16.msra.mxu0 %v609
      %721 = vmatprep.subr.bf16.mxu0 0
      %722 = vmatpush2.bf16.msra.mxu0 %v624
      %723 = vmatprep.subr.bf16.mxu0 0
      %724 = vmatpush2.bf16.msra.mxu0 %v623
      %725 = vmatprep.subr.bf16.mxu0 0
      %726 = vmatpush2.bf16.msra.mxu0 %v622
      %727 = vmatprep.subr.bf16.mxu0 0
      %728 = vmatpush2.bf16.msra.mxu0 %v621
      %729 = vmatprep.subr.bf16.mxu0 0
      %730 = vmatpush2.bf16.msra.mxu0 %v620
      %731 = vmatprep.subr.bf16.mxu0 0
      %732 = vmatpush2.bf16.msra.mxu0 %v619
      %733 = vmatprep.subr.bf16.mxu0 0
      %734 = vmatpush2.bf16.msra.mxu0 %v618
      %735 = vmatprep.subr.bf16.mxu0 0
      %736 = vmatpush2.bf16.msra.mxu0 %v617
      %737 = vmatprep.mubr.bf16.mxu0 %v309
      %738 = vmatmul.mubr.bf16.gmra.mxu0 %v308
      %v739 = vpop.f32.mrf.mxu0
      %v740 = vadd.f32 %v415, %v739
      %v741 = vpop.f32.mrf.mxu0
      %v742 = vpop.f32.mrf.mxu0
      %v743 = vpop.f32.mrf.mxu0
      %744 = vdwg.mxu0
      %745 = vmatprep.subr.bf16.mxu0 0
      %746 = vmatpush1.bf16.msra.mxu0 %v632
      %747 = vmatprep.subr.bf16.mxu0 0
      %748 = vmatpush1.bf16.msra.mxu0 %v631
      %749 = vmatprep.subr.bf16.mxu0 0
      %750 = vmatpush1.bf16.msra.mxu0 %v630
      %751 = vmatprep.subr.bf16.mxu0 0
      %752 = vmatpush1.bf16.msra.mxu0 %v629
      %753 = vmatprep.subr.bf16.mxu0 0
      %754 = vmatpush1.bf16.msra.mxu0 %v628
      %755 = vmatprep.subr.bf16.mxu0 0
      %756 = vmatpush1.bf16.msra.mxu0 %v627
      %757 = vmatprep.subr.bf16.mxu0 0
      %758 = vmatpush1.bf16.msra.mxu0 %v626
      %759 = vmatprep.subr.bf16.mxu0 0
      %760 = vmatpush1.bf16.msra.mxu0 %v625
      %761 = vmatprep.subr.bf16.mxu0 0
      %762 = vmatpush2.bf16.msra.mxu0 %v640
      %763 = vmatprep.subr.bf16.mxu0 0
      %764 = vmatpush2.bf16.msra.mxu0 %v639
      %765 = vmatprep.subr.bf16.mxu0 0
      %766 = vmatpush2.bf16.msra.mxu0 %v638
      %767 = vmatprep.subr.bf16.mxu0 0
      %768 = vmatpush2.bf16.msra.mxu0 %v637
      %769 = vmatprep.subr.bf16.mxu0 0
      %770 = vmatpush2.bf16.msra.mxu0 %v636
      %771 = vmatprep.subr.bf16.mxu0 0
      %772 = vmatpush2.bf16.msra.mxu0 %v635
      %773 = vmatprep.subr.bf16.mxu0 0
      %774 = vmatpush2.bf16.msra.mxu0 %v634
      %775 = vmatprep.subr.bf16.mxu0 0
      %776 = vmatpush2.bf16.msra.mxu0 %v633
      %777 = vmatprep.mubr.bf16.mxu0 %v311
      %778 = vmatmul.mubr.bf16.gmra.mxu0 %v310
      %v779 = vpop.f32.mrf.mxu0
      %v780 = vadd.f32 %v740, %v779
      %v781 = vpop.f32.mrf.mxu0
      %v782 = vpop.f32.mrf.mxu0
      %v783 = vpop.f32.mrf.mxu0
      %784 = vdwg.mxu0
      %785 = vmatprep.subr.bf16.mxu0 0
      %786 = vmatpush1.bf16.msra.mxu0 %v648
      %787 = vmatprep.subr.bf16.mxu0 0
      %788 = vmatpush1.bf16.msra.mxu0 %v647
      %789 = vmatprep.subr.bf16.mxu0 0
      %790 = vmatpush1.bf16.msra.mxu0 %v646
      %791 = vmatprep.subr.bf16.mxu0 0
      %792 = vmatpush1.bf16.msra.mxu0 %v645
      %793 = vmatprep.subr.bf16.mxu0 0
      %794 = vmatpush1.bf16.msra.mxu0 %v644
      %795 = vmatprep.subr.bf16.mxu0 0
      %796 = vmatpush1.bf16.msra.mxu0 %v643
      %797 = vmatprep.subr.bf16.mxu0 0
      %798 = vmatpush1.bf16.msra.mxu0 %v642
      %799 = vmatprep.subr.bf16.mxu0 0
      %800 = vmatpush1.bf16.msra.mxu0 %v641
      %801 = vmatprep.subr.bf16.mxu0 0
      %802 = vmatpush2.bf16.msra.mxu0 %v656
      %803 = vmatprep.subr.bf16.mxu0 0
      %804 = vmatpush2.bf16.msra.mxu0 %v655
      %805 = vmatprep.subr.bf16.mxu0 0
      %806 = vmatpush2.bf16.msra.mxu0 %v654
      %807 = vmatprep.subr.bf16.mxu0 0
      %808 = vmatpush2.bf16.msra.mxu0 %v653
      %809 = vmatprep.subr.bf16.mxu0 0
      %810 = vmatpush2.bf16.msra.mxu0 %v652
      %811 = vmatprep.subr.bf16.mxu0 0
      %812 = vmatpush2.bf16.msra.mxu0 %v651
      %813 = vmatprep.subr.bf16.mxu0 0
      %814 = vmatpush2.bf16.msra.mxu0 %v650
      %815 = vmatprep.subr.bf16.mxu0 0
      %816 = vmatpush2.bf16.msra.mxu0 %v649
      %817 = vmatprep.mubr.bf16.mxu0 %v313
      %818 = vmatmul.mubr.bf16.gmra.mxu0 %v312
      %v819 = vpop.f32.mrf.mxu0
      %v820 = vadd.f32 %v780, %v819
      %v821 = vpop.f32.mrf.mxu0
      %v822 = vpop.f32.mrf.mxu0
      %v823 = vpop.f32.mrf.mxu0
      %824 = vdwg.mxu0
      %v825 = vpack.c.bf16 %v820, %v820
      %v826 = vld [vmem:[#allocation8] sm:$0xf]
      %v827 = vld [vmem:[#allocation8 + $0x4] sm:$0xf]
      %v828 = vld [vmem:[#allocation8 + $0x8] sm:$0xf]
      %v829 = vld [vmem:[#allocation8 + $0xc] sm:$0xf]
      %v830 = vld [vmem:[#allocation8 + $0x10] sm:$0xf]
      %v831 = vld [vmem:[#allocation8 + $0x14] sm:$0xf]
      %v832 = vld [vmem:[#allocation8 + $0x18] sm:$0xf]
      %v833 = vld [vmem:[#allocation8 + $0x1c] sm:$0xf]
      %v834 = vld [vmem:[#allocation8 + $0x20] sm:$0xf]
      %v835 = vld [vmem:[#allocation8 + $0x24] sm:$0xf]
      %v836 = vld [vmem:[#allocation8 + $0x28] sm:$0xf]
      %v837 = vld [vmem:[#allocation8 + $0x2c] sm:$0xf]
      %v838 = vld [vmem:[#allocation8 + $0x30] sm:$0xf]
      %v839 = vld [vmem:[#allocation8 + $0x34] sm:$0xf]
      %v840 = vld [vmem:[#allocation8 + $0x38] sm:$0xf]
      %v841 = vld [vmem:[#allocation8 + $0x3c] sm:$0xf]
      %v842 = vld [vmem:[%s4] sm:$0x1]
      %v844 = vlaneseq
      %v845 = vshrl.u32 %v844, 7
      %v846 = vsub.s32 0, %v845
      %v847 = vrot.slane %v842, %v846
      %v865 = vunpack.c.l.b16 %v826
      %v866 = vunpack.c.l.b16 %v827
      %v867 = vunpack.c.l.b16 %v828
      %v868 = vunpack.c.l.b16 %v829
      %v869 = vunpack.c.l.b16 %v830
      %v870 = vunpack.c.l.b16 %v831
      %v871 = vunpack.c.l.b16 %v832
      %v872 = vunpack.c.l.b16 %v833
      %v873 = vunpack.c.l.b16 %v834
      %v874 = vunpack.c.l.b16 %v835
      %v875 = vunpack.c.l.b16 %v836
      %v876 = vunpack.c.l.b16 %v837
      %v877 = vunpack.c.l.b16 %v838
      %v878 = vunpack.c.l.b16 %v839
      %v879 = vunpack.c.l.b16 %v840
      %v880 = vunpack.c.l.b16 %v841
      %v881 = vpack.c.b16 %v866, %v865
      %v882 = vpack.c.b16 %v868, %v867
      %v883 = vpack.c.b16 %v870, %v869
      %v884 = vpack.c.b16 %v872, %v871
      %v885 = vpack.c.b16 %v874, %v873
      %v886 = vpack.c.b16 %v876, %v875
      %v887 = vpack.c.b16 %v878, %v877
      %v888 = vpack.c.b16 %v880, %v879
      %897 = vmatprep.subr.bf16.mxu0 0
      %898 = vmatpush1.bf16.msra.mxu0 %v888
      %899 = vmatprep.subr.bf16.mxu0 0
      %900 = vmatpush1.bf16.msra.mxu0 %v887
      %901 = vmatprep.subr.bf16.mxu0 0
      %902 = vmatpush1.bf16.msra.mxu0 %v886
      %903 = vmatprep.subr.bf16.mxu0 0
      %904 = vmatpush1.bf16.msra.mxu0 %v885
      %905 = vmatprep.subr.bf16.mxu0 0
      %906 = vmatpush1.bf16.msra.mxu0 %v884
      %907 = vmatprep.subr.bf16.mxu0 0
      %908 = vmatpush1.bf16.msra.mxu0 %v883
      %909 = vmatprep.subr.bf16.mxu0 0
      %910 = vmatpush1.bf16.msra.mxu0 %v882
      %911 = vmatprep.subr.bf16.mxu0 0
      %912 = vmatpush1.bf16.msra.mxu0 %v881
      %913 = vmatprep.subr.bf16.mxu0 0
      %914 = vmatpush2.bf16.msra.mxu0 0
      %915 = vmatprep.subr.bf16.mxu0 0
      %916 = vmatpush2.bf16.msra.mxu0 0
      %917 = vmatprep.subr.bf16.mxu0 0
      %918 = vmatpush2.bf16.msra.mxu0 0
      %919 = vmatprep.subr.bf16.mxu0 0
      %920 = vmatpush2.bf16.msra.mxu0 0
      %921 = vmatprep.subr.bf16.mxu0 0
      %922 = vmatpush2.bf16.msra.mxu0 0
      %923 = vmatprep.subr.bf16.mxu0 0
      %924 = vmatpush2.bf16.msra.mxu0 0
      %925 = vmatprep.subr.bf16.mxu0 0
      %926 = vmatpush2.bf16.msra.mxu0 0
      %927 = vmatprep.subr.bf16.mxu0 0
      %928 = vmatpush2.bf16.msra.mxu0 0
      %929 = vmatprep.mubr.bf16.mxu0 0
      %930 = vmatmul.mubr.bf16.gmra.mxu0 %v825
      %v931 = vpop.f32.mrf.mxu0
      %v932 = vadd.f32 %v847, %v931
      %v933 = vpop.f32.mrf.mxu0
      %v934 = vpop.f32.mrf.mxu0
      %v935 = vpop.f32.mrf.mxu0
      %936 = vdwg.mxu0
      %v937 = vmax.f32 %v932, 0.0
      %938 = vst [vmem:[#allocation9] sm:$0x3] %v937
    $region41: #{tpu_custom_call.1} parent=1 // pred_fallthru
      _
    // Predicated region
    $region42: #{tpu_custom_call.1} parent=1 // pred_check
      _
    $region43: #{tpu_custom_call.1} parent=1 // pred_check_branch
      %940 = sbr.rel (0) target = $region45
    $region44: #{tpu_custom_call.1} parent=1 // pred_region
      %s942 = ssub.s32 32, 32
      %943 = vsyncadd [#allocation5], %s942
      %s945 = sshll.u32 [#allocation9], 4
      %s946 = int_to_ptr.vmem [resolvable:$true] %s945
      %948 = dma.vmem_to_hbm [thread:$0]  %s946, 32, %s5, [#allocation5]
    $region45: #{tpu_custom_call.1} parent=1 // pred_fallthru
      _
    // Predicated region
    $region46: #{tpu_custom_call.1} parent=1 // pred_check
      _
    $region47: #{tpu_custom_call.1} parent=1 // pred_check_branch
      %950 = sbr.rel (0) target = $region49
    $region48: #{tpu_custom_call.1} parent=1 // pred_region
      %951 = dma.done [#allocation5], 32
    $region49: #{tpu_custom_call.1} parent=1 // pred_fallthru
      _
    %952 = vsyncpa [#allocation4], 1
    %953 = vsyncpa [#allocation7], 1
    %954 = vsyncpa [#allocation5], 1

</llo_original>
